<compile_context>
chip_gen: v7x
topology: tpu7x:2x2x1
jax: 0.10.0
libtpu: 0.0.40
codegen_flags: <defaults>
</compile_context>

<pallas_src>
import jax
import jax.numpy as jnp
from jax.experimental import pallas as pl
from jax.experimental.pallas import tpu as pltpu

EPS = 1e-5
OUT_DIM = 34
OUT_PAD = 128  # lane-dense padded policy-head width


def _round_up(x, m):
    return ((x + m - 1) // m) * m


# ----------------------------------------------------------------------------- kernel


def discardnet_kernel(
    x_ref,                 # (TB, F_pad) f32   (bn1 already folded into w1/b1)
    w1_ref, b1_ref,        # fc1 (bn1-folded):   F_pad  -> hidden
    w2_ref, b2_ref,        # fc2 (bn2-folded):   hidden -> hidden
    w3_ref, b3_ref,        # fc3 (bn2-folded)
    w4_ref, b4_ref,        # fc4 (bn2-folded)
    w5_ref, b5_ref,        # fc5 (bn2-folded):   hidden -> 64
    wp_ref, bp_ref,        # policy head, zero-padded to OUT_PAD lanes
    out_ref,               # (TB, OUT_PAD) bf16
):
    def layer(h_lo, w_ref, b_ref):
        # bf16 operands -> MXU fast path; accumulate + bias + ReLU in f32.
        acc = jnp.dot(h_lo, w_ref[...], preferred_element_type=jnp.float32)
        return jnp.maximum(acc + b_ref[...], 0.0)

    # Cast x to the MXU matmul dtype in-kernel (cheap VPU op; avoids a separate
    # XLA pad/cast pass over the input in HBM).
    h = layer(x_ref[...].astype(w1_ref.dtype), w1_ref, b1_ref)     # relu(fc1(bn1(x)))
    for w_ref, b_ref in ((w2_ref, b2_ref), (w3_ref, b3_ref),
                         (w4_ref, b4_ref), (w5_ref, b5_ref)):       # relu(fc_k(bn2(h)))
        h = layer(h.astype(w_ref.dtype), w_ref, b_ref)

    # TODO(synk): if MXU-bound after tiling fixes, pack consecutive 64-wide layers
    # into block-diagonal 128/256-wide weights to raise MXU utilization.

    # relu(policy(h)).view(-1, 34): padded columns are exactly 0 after ReLU.
    out = layer(h.astype(wp_ref.dtype), wp_ref, bp_ref)
    out_ref[...] = out.astype(out_ref.dtype)


# ----------------------------------------------------------------------------- wrapper


def _choose_tb(B, block_b, F_pad, min_steps=2):
    """Pick the batch tile. Big tiles amortize the ~0.35us per-grid-step overhead
    (VMEM is nowhere near the limit for this network), but cap at ceil(B/min_steps)
    so the 'parallel' grid has >= 2 steps and both v7x TensorCores get work."""
    target = _round_up(pl.cdiv(B, min_steps), 16)   # multiple of 16: sublane-packed
    tb = max(16, min(block_b, target))
    # VMEM sanity cap: double-buffered f32 x block + bf16 out block <= ~24 MiB.
    bytes_per_row = 4 * F_pad + 2 * OUT_PAD
    cap = max(16, ((24 << 20) // (2 * bytes_per_row)) // 16 * 16)
    tb = min(tb, cap)
    # Never exceed the sublane-rounded batch (exact fit for tiny demo batches).
    return min(tb, _round_up(B, 8))


def discardnet_forward(x, kernel_params, *, block_b=4096, unpad=True):
    """x: (B, F) f32. kernel_params: output of fold_and_pad_params().

    Returns (B, 34) when unpad=True (module semantics). Perf-sensitive callers
    should pass unpad=False and consume the padded (B, 128) bf16 layout directly
    (pad lanes are exactly 0), fusing any slice/argmax into the downstream op."""
    B, F = x.shape
    F_pad = kernel_params[0].shape[0]
    if F != F_pad:
        # Rare path: keep the fc1 contraction lane-dense when F % 128 != 0.
        x = jnp.pad(x, ((0, 0), (0, F_pad - F)))
    if x.dtype != jnp.float32:
        x = x.astype(jnp.float32)

    TB = _choose_tb(B, block_b, F_pad)
    grid = (pl.cdiv(B, TB),)   # no batch padding: partial edge block is masked

    # x / out are tiled over the batch grid; weights/biases are full-array blocks
    # with a constant index_map so they remain VMEM-resident across grid steps.
    in_specs = [pl.BlockSpec((TB, F_pad), lambda i: (i, 0))]
    in_specs += [pl.BlockSpec(p.shape, lambda i: (0, 0)) for p in kernel_params]
    out_specs = pl.BlockSpec((TB, OUT_PAD), lambda i: (i, 0))

    weights = kernel_params[0::2]
    flops = sum(2 * B * w.shape[0] * w.shape[1] for w in weights)
    bytes_accessed = (
        B * F_pad * 4                       # f32 input read
        + B * OUT_PAD * 2                   # bf16 output write
        + sum(int(p.size) * p.dtype.itemsize for p in kernel_params)
    )
    cost = pl.CostEstimate(flops=flops, transcendentals=0,
                           bytes_accessed=bytes_accessed)

    out = pl.pallas_call(
        discardnet_kernel,
        out_shape=jax.ShapeDtypeStruct((B, OUT_PAD), jnp.bfloat16),
        grid=grid,
        in_specs=in_specs,
        out_specs=out_specs,
        compiler_params=pltpu.CompilerParams(
            dimension_semantics=("parallel",),
        ),
        cost_estimate=cost,
    )(x, *kernel_params)

    return out[:, :OUT_DIM] if unpad else out


# --------------------------------------------------------------------- param plumbing


def _linear_init(kw, kb, fan_in, fan_out):
    # PyTorch nn.Linear default init: U(-1/sqrt(fan_in), 1/sqrt(fan_in))
    bound = 1.0 / float(fan_in) ** 0.5
    w = jax.random.uniform(kw, (fan_in, fan_out), jnp.float32, -bound, bound)
    b = jax.random.uniform(kb, (1, fan_out), jnp.float32, -bound, bound)
    return w, b


def _bn_fold(kg, kb, km, kv, feat):
    gamma = 1.0 + 0.1 * jax.random.normal(kg, (1, feat), jnp.float32)
    beta = 0.1 * jax.random.normal(kb, (1, feat), jnp.float32)
    mean = 0.1 * jax.random.normal(km, (1, feat), jnp.float32)
    var = jnp.abs(jax.random.normal(kv, (1, feat), jnp.float32)) + 0.5
    scale = gamma / jnp.sqrt(var + EPS)
    shift = beta - mean * scale
    return scale, shift


def init_params(key, in_features, hidden=64):
    """Raw (un-folded) params, matching the PyTorch module structure."""
    ks = jax.random.split(key, 24)
    bn1_s, bn1_b = _bn_fold(ks[0], ks[1], ks[2], ks[3], in_features)
    bn2_s, bn2_b = _bn_fold(ks[4], ks[5], ks[6], ks[7], hidden)
    w1, b1 = _linear_init(ks[8], ks[9], in_features, hidden)
    w2, b2 = _linear_init(ks[10], ks[11], hidden, hidden)
    w3, b3 = _linear_init(ks[12], ks[13], hidden, hidden)
    w4, b4 = _linear_init(ks[14], ks[15], hidden, hidden)
    w5, b5 = _linear_init(ks[16], ks[17], hidden, 64)      # MahjongNet out = 64
    wp, bp = _linear_init(ks[18], ks[19], 64, OUT_DIM)     # policy head
    return (bn1_s, bn1_b, w1, b1, bn2_s, bn2_b,
            w2, b2, w3, b3, w4, b4, w5, b5, wp, bp)


def fold_and_pad_params(params, matmul_dtype=jnp.bfloat16):
    """Fold BN affines into the consuming Linear layers, zero-pad in_features to a
    multiple of 128 and the policy head to OUT_PAD lanes, and cast weight matrices
    to the MXU matmul dtype (biases stay f32)."""
    (bn1_s, bn1_b, w1, b1, bn2_s, bn2_b,
     w2, b2, w3, b3, w4, b4, w5, b5, wp, bp) = params

    def fold(scale, shift, w, b):
        # relu((x*scale + shift) @ W + b) == relu(x @ (scale^T * W) + (shift @ W + b))
        return scale.reshape(-1, 1) * w, b + shift @ w

    w1f, b1f = fold(bn1_s, bn1_b, w1, b1)
    w2f, b2f = fold(bn2_s, bn2_b, w2, b2)
    w3f, b3f = fold(bn2_s, bn2_b, w3, b3)
    w4f, b4f = fold(bn2_s, bn2_b, w4, b4)
    w5f, b5f = fold(bn2_s, bn2_b, w5, b5)

    # Lane-dense fc1 contraction: pad in_features (rows of w1) to a multiple of 128.
    feat = w1f.shape[0]
    feat_pad = _round_up(feat, 128)
    if feat_pad != feat:
        w1f = jnp.pad(w1f, ((0, feat_pad - feat), (0, 0)))

    # Lane-dense policy head: pad 34 -> OUT_PAD output columns (zeros).
    wp_pad = jnp.zeros((wp.shape[0], OUT_PAD), jnp.float32).at[:, :OUT_DIM].set(wp)
    bp_pad = jnp.zeros((1, OUT_PAD), jnp.float32).at[:, :OUT_DIM].set(bp)

    kernel_params = []
    for w, b in ((w1f, b1f), (w2f, b2f), (w3f, b3f),
                 (w4f, b4f), (w5f, b5f), (wp_pad, bp_pad)):
        kernel_params.append(w.astype(matmul_dtype))
        kernel_params.append(b.astype(jnp.float32))
    return tuple(kernel_params)


def reference_forward(x, params):
    """Pure-f32 JAX reference of the eval-mode PyTorch forward."""
    (bn1_s, bn1_b, w1, b1, bn2_s, bn2_b,
     w2, b2, w3, b3, w4, b4, w5, b5, wp, bp) = params
    h = x * bn1_s + bn1_b
    h = jnp.maximum(h @ w1 + b1, 0.0)
    for w, b in ((w2, b2), (w3, b3), (w4, b4), (w5, b5)):
        h = jnp.maximum((h * bn2_s + bn2_b) @ w + b, 0.0)
    return jnp.maximum(h @ wp + bp, 0.0).reshape(-1, OUT_DIM)


if __name__ == "__main__":
    B, IN_FEATURES, HIDDEN = 8, 128, 64
    key = jax.random.PRNGKey(0)
    kx, kp = jax.random.split(key)
    x = jax.random.normal(kx, (B, IN_FEATURES), jnp.float32)

    params = init_params(kp, IN_FEATURES, HIDDEN)
    kernel_params = fold_and_pad_params(params)

    out = discardnet_forward(x, kernel_params)       # (B, 34), module semantics
    out = jax.block_until_ready(out)

    ref = reference_forward(x, params)
    assert out.shape == (B, OUT_DIM), out.shape
    # bf16 matmul operands + bf16 output (f32 accumulation) vs pure-f32 reference.
    assert jnp.allclose(out.astype(jnp.float32), ref, atol=5e-2, rtol=5e-2), \
        "mismatch vs reference"
    print("KERNEL_OK")
</pallas_src>

<mosaic_0001>
module attributes {stable_mosaic.version = 11 : i64} {
  func.func @discardnet_kernel(%arg0: i32, %arg1: memref<8x128xf32, #tpu.memory_space<vmem>>, %arg2: memref<128x64xbf16, #tpu.memory_space<vmem>>, %arg3: memref<1x64xf32, #tpu.memory_space<vmem>>, %arg4: memref<64x64xbf16, #tpu.memory_space<vmem>>, %arg5: memref<1x64xf32, #tpu.memory_space<vmem>>, %arg6: memref<64x64xbf16, #tpu.memory_space<vmem>>, %arg7: memref<1x64xf32, #tpu.memory_space<vmem>>, %arg8: memref<64x64xbf16, #tpu.memory_space<vmem>>, %arg9: memref<1x64xf32, #tpu.memory_space<vmem>>, %arg10: memref<64x64xbf16, #tpu.memory_space<vmem>>, %arg11: memref<1x64xf32, #tpu.memory_space<vmem>>, %arg12: memref<64x128xbf16, #tpu.memory_space<vmem>>, %arg13: memref<1x128xf32, #tpu.memory_space<vmem>>, %arg14: memref<8x128xbf16, #tpu.memory_space<vmem>>) attributes {dimension_semantics = [#tpu.dimension_semantics<parallel>], iteration_bounds = array<i64: 1>, scalar_prefetch = 0 : i64, scratch_operands = 0 : i64, tpu.core_type = #tpu.core_type<tc>, window_params = [{transform_indices = @transform_0, window_bounds = array<i64: 8, 128>}, {pipeline_mode = #tpu.pipeline_mode<synchronous>, transform_indices = @transform_1, window_bounds = array<i64: 128, 64>}, {pipeline_mode = #tpu.pipeline_mode<synchronous>, transform_indices = @transform_2, window_bounds = array<i64: 1, 64>}, {pipeline_mode = #tpu.pipeline_mode<synchronous>, transform_indices = @transform_3, window_bounds = array<i64: 64, 64>}, {pipeline_mode = #tpu.pipeline_mode<synchronous>, transform_indices = @transform_4, window_bounds = array<i64: 1, 64>}, {pipeline_mode = #tpu.pipeline_mode<synchronous>, transform_indices = @transform_5, window_bounds = array<i64: 64, 64>}, {pipeline_mode = #tpu.pipeline_mode<synchronous>, transform_indices = @transform_6, window_bounds = array<i64: 1, 64>}, {pipeline_mode = #tpu.pipeline_mode<synchronous>, transform_indices = @transform_7, window_bounds = array<i64: 64, 64>}, {pipeline_mode = #tpu.pipeline_mode<synchronous>, transform_indices = @transform_8, window_bounds = array<i64: 1, 64>}, {pipeline_mode = #tpu.pipeline_mode<synchronous>, transform_indices = @transform_9, window_bounds = array<i64: 64, 64>}, {pipeline_mode = #tpu.pipeline_mode<synchronous>, transform_indices = @transform_10, window_bounds = array<i64: 1, 64>}, {pipeline_mode = #tpu.pipeline_mode<synchronous>, transform_indices = @transform_11, window_bounds = array<i64: 64, 128>}, {pipeline_mode = #tpu.pipeline_mode<synchronous>, transform_indices = @transform_12, window_bounds = array<i64: 1, 128>}, {transform_indices = @transform_13, window_bounds = array<i64: 8, 128>}]} {
    %c0 = arith.constant 0 : index
    %c0_0 = arith.constant 0 : index
    %0 = vector.load %arg1[%c0, %c0_0] : memref<8x128xf32, #tpu.memory_space<vmem>>, vector<8x128xf32>
    %1 = arith.truncf %0 : vector<8x128xf32> to vector<8x128xbf16>
    %c0_1 = arith.constant 0 : index
    %c0_2 = arith.constant 0 : index
    %2 = vector.load %arg2[%c0_1, %c0_2] : memref<128x64xbf16, #tpu.memory_space<vmem>>, vector<128x64xbf16>
    %cst = arith.constant dense<0.000000e+00> : vector<8x64xf32>
    %3 = tpu.matmul %1, %2, %cst {dimension_numbers = #tpu.dot_dimension_numbers<[1], [0], [0], [1], [0, 0, 1, 1], [], []>} : vector<8x128xbf16>, vector<128x64xbf16>, vector<8x64xf32> -> vector<8x64xf32>
    %c0_3 = arith.constant 0 : index
    %c0_4 = arith.constant 0 : index
    %4 = vector.load %arg3[%c0_3, %c0_4] : memref<1x64xf32, #tpu.memory_space<vmem>>, vector<1x64xf32>
    %5 = vector.broadcast %4 : vector<1x64xf32> to vector<8x64xf32>
    %6 = arith.addf %3, %5 : vector<8x64xf32>
    %cst_5 = arith.constant 0.000000e+00 : f32
    %7 = vector.broadcast %cst_5 : f32 to vector<8x64xf32>
    %8 = arith.maximumf %6, %7 : vector<8x64xf32>
    %9 = arith.truncf %8 : vector<8x64xf32> to vector<8x64xbf16>
    %c0_6 = arith.constant 0 : index
    %c0_7 = arith.constant 0 : index
    %10 = vector.load %arg4[%c0_6, %c0_7] : memref<64x64xbf16, #tpu.memory_space<vmem>>, vector<64x64xbf16>
    %cst_8 = arith.constant dense<0.000000e+00> : vector<8x64xf32>
    %11 = tpu.matmul %9, %10, %cst_8 {dimension_numbers = #tpu.dot_dimension_numbers<[1], [0], [0], [1], [0, 0, 1, 1], [], []>} : vector<8x64xbf16>, vector<64x64xbf16>, vector<8x64xf32> -> vector<8x64xf32>
    %c0_9 = arith.constant 0 : index
    %c0_10 = arith.constant 0 : index
    %12 = vector.load %arg5[%c0_9, %c0_10] : memref<1x64xf32, #tpu.memory_space<vmem>>, vector<1x64xf32>
    %13 = vector.broadcast %12 : vector<1x64xf32> to vector<8x64xf32>
    %14 = arith.addf %11, %13 : vector<8x64xf32>
    %cst_11 = arith.constant 0.000000e+00 : f32
    %15 = vector.broadcast %cst_11 : f32 to vector<8x64xf32>
    %16 = arith.maximumf %14, %15 : vector<8x64xf32>
    %17 = arith.truncf %16 : vector<8x64xf32> to vector<8x64xbf16>
    %c0_12 = arith.constant 0 : index
    %c0_13 = arith.constant 0 : index
    %18 = vector.load %arg6[%c0_12, %c0_13] : memref<64x64xbf16, #tpu.memory_space<vmem>>, vector<64x64xbf16>
    %cst_14 = arith.constant dense<0.000000e+00> : vector<8x64xf32>
    %19 = tpu.matmul %17, %18, %cst_14 {dimension_numbers = #tpu.dot_dimension_numbers<[1], [0], [0], [1], [0, 0, 1, 1], [], []>} : vector<8x64xbf16>, vector<64x64xbf16>, vector<8x64xf32> -> vector<8x64xf32>
    %c0_15 = arith.constant 0 : index
    %c0_16 = arith.constant 0 : index
    %20 = vector.load %arg7[%c0_15, %c0_16] : memref<1x64xf32, #tpu.memory_space<vmem>>, vector<1x64xf32>
    %21 = vector.broadcast %20 : vector<1x64xf32> to vector<8x64xf32>
    %22 = arith.addf %19, %21 : vector<8x64xf32>
    %cst_17 = arith.constant 0.000000e+00 : f32
    %23 = vector.broadcast %cst_17 : f32 to vector<8x64xf32>
    %24 = arith.maximumf %22, %23 : vector<8x64xf32>
    %25 = arith.truncf %24 : vector<8x64xf32> to vector<8x64xbf16>
    %c0_18 = arith.constant 0 : index
    %c0_19 = arith.constant 0 : index
    %26 = vector.load %arg8[%c0_18, %c0_19] : memref<64x64xbf16, #tpu.memory_space<vmem>>, vector<64x64xbf16>
    %cst_20 = arith.constant dense<0.000000e+00> : vector<8x64xf32>
    %27 = tpu.matmul %25, %26, %cst_20 {dimension_numbers = #tpu.dot_dimension_numbers<[1], [0], [0], [1], [0, 0, 1, 1], [], []>} : vector<8x64xbf16>, vector<64x64xbf16>, vector<8x64xf32> -> vector<8x64xf32>
    %c0_21 = arith.constant 0 : index
    %c0_22 = arith.constant 0 : index
    %28 = vector.load %arg9[%c0_21, %c0_22] : memref<1x64xf32, #tpu.memory_space<vmem>>, vector<1x64xf32>
    %29 = vector.broadcast %28 : vector<1x64xf32> to vector<8x64xf32>
    %30 = arith.addf %27, %29 : vector<8x64xf32>
    %cst_23 = arith.constant 0.000000e+00 : f32
    %31 = vector.broadcast %cst_23 : f32 to vector<8x64xf32>
    %32 = arith.maximumf %30, %31 : vector<8x64xf32>
    %33 = arith.truncf %32 : vector<8x64xf32> to vector<8x64xbf16>
    %c0_24 = arith.constant 0 : index
    %c0_25 = arith.constant 0 : index
    %34 = vector.load %arg10[%c0_24, %c0_25] : memref<64x64xbf16, #tpu.memory_space<vmem>>, vector<64x64xbf16>
    %cst_26 = arith.constant dense<0.000000e+00> : vector<8x64xf32>
    %35 = tpu.matmul %33, %34, %cst_26 {dimension_numbers = #tpu.dot_dimension_numbers<[1], [0], [0], [1], [0, 0, 1, 1], [], []>} : vector<8x64xbf16>, vector<64x64xbf16>, vector<8x64xf32> -> vector<8x64xf32>
    %c0_27 = arith.constant 0 : index
    %c0_28 = arith.constant 0 : index
    %36 = vector.load %arg11[%c0_27, %c0_28] : memref<1x64xf32, #tpu.memory_space<vmem>>, vector<1x64xf32>
    %37 = vector.broadcast %36 : vector<1x64xf32> to vector<8x64xf32>
    %38 = arith.addf %35, %37 : vector<8x64xf32>
    %cst_29 = arith.constant 0.000000e+00 : f32
    %39 = vector.broadcast %cst_29 : f32 to vector<8x64xf32>
    %40 = arith.maximumf %38, %39 : vector<8x64xf32>
    %41 = arith.truncf %40 : vector<8x64xf32> to vector<8x64xbf16>
    %c0_30 = arith.constant 0 : index
    %c0_31 = arith.constant 0 : index
    %42 = vector.load %arg12[%c0_30, %c0_31] : memref<64x128xbf16, #tpu.memory_space<vmem>>, vector<64x128xbf16>
    %cst_32 = arith.constant dense<0.000000e+00> : vector<8x128xf32>
    %43 = tpu.matmul %41, %42, %cst_32 {dimension_numbers = #tpu.dot_dimension_numbers<[1], [0], [0], [1], [0, 0, 1, 1], [], []>} : vector<8x64xbf16>, vector<64x128xbf16>, vector<8x128xf32> -> vector<8x128xf32>
    %c0_33 = arith.constant 0 : index
    %c0_34 = arith.constant 0 : index
    %44 = vector.load %arg13[%c0_33, %c0_34] : memref<1x128xf32, #tpu.memory_space<vmem>>, vector<1x128xf32>
    %45 = vector.broadcast %44 : vector<1x128xf32> to vector<8x128xf32>
    %46 = arith.addf %43, %45 : vector<8x128xf32>
    %cst_35 = arith.constant 0.000000e+00 : f32
    %47 = vector.broadcast %cst_35 : f32 to vector<8x128xf32>
    %48 = arith.maximumf %46, %47 : vector<8x128xf32>
    %49 = arith.truncf %48 : vector<8x128xf32> to vector<8x128xbf16>
    %c0_36 = arith.constant 0 : index
    %c0_37 = arith.constant 0 : index
    %50 = vector.load %arg14[%c0_36, %c0_37] : memref<8x128xbf16, #tpu.memory_space<vmem>>, vector<8x128xbf16>
    tpu.vector_store %arg14[%c0_36, %c0_37], %49 {strides = array<i32>} : memref<8x128xbf16, #tpu.memory_space<vmem>>, vector<8x128xbf16>,
    return
  }
  func.func @transform_0(%arg0: i32) -> (i32, i32) {
    %c0_i32 = arith.constant 0 : i32
    %c0_i32_0 = arith.constant 0 : i32
    return %arg0, %c0_i32 : i32, i32
  }
  func.func @transform_1(%arg0: i32) -> (i32, i32) {
    %c0_i32 = arith.constant 0 : i32
    %c0_i32_0 = arith.constant 0 : i32
    %c0_i32_1 = arith.constant 0 : i32
    return %c0_i32, %c0_i32_0 : i32, i32
  }
  func.func @transform_2(%arg0: i32) -> (i32, i32) {
    %c0_i32 = arith.constant 0 : i32
    %c0_i32_0 = arith.constant 0 : i32
    %c0_i32_1 = arith.constant 0 : i32
    return %c0_i32, %c0_i32_0 : i32, i32
  }
  func.func @transform_3(%arg0: i32) -> (i32, i32) {
    %c0_i32 = arith.constant 0 : i32
    %c0_i32_0 = arith.constant 0 : i32
    %c0_i32_1 = arith.constant 0 : i32
    return %c0_i32, %c0_i32_0 : i32, i32
  }
  func.func @transform_4(%arg0: i32) -> (i32, i32) {
    %c0_i32 = arith.constant 0 : i32
    %c0_i32_0 = arith.constant 0 : i32
    %c0_i32_1 = arith.constant 0 : i32
    return %c0_i32, %c0_i32_0 : i32, i32
  }
  func.func @transform_5(%arg0: i32) -> (i32, i32) {
    %c0_i32 = arith.constant 0 : i32
    %c0_i32_0 = arith.constant 0 : i32
    %c0_i32_1 = arith.constant 0 : i32
    return %c0_i32, %c0_i32_0 : i32, i32
  }
  func.func @transform_6(%arg0: i32) -> (i32, i32) {
    %c0_i32 = arith.constant 0 : i32
    %c0_i32_0 = arith.constant 0 : i32
    %c0_i32_1 = arith.constant 0 : i32
    return %c0_i32, %c0_i32_0 : i32, i32
  }
  func.func @transform_7(%arg0: i32) -> (i32, i32) {
    %c0_i32 = arith.constant 0 : i32
    %c0_i32_0 = arith.constant 0 : i32
    %c0_i32_1 = arith.constant 0 : i32
    return %c0_i32, %c0_i32_0 : i32, i32
  }
  func.func @transform_8(%arg0: i32) -> (i32, i32) {
    %c0_i32 = arith.constant 0 : i32
    %c0_i32_0 = arith.constant 0 : i32
    %c0_i32_1 = arith.constant 0 : i32
    return %c0_i32, %c0_i32_0 : i32, i32
  }
  func.func @transform_9(%arg0: i32) -> (i32, i32) {
    %c0_i32 = arith.constant 0 : i32
    %c0_i32_0 = arith.constant 0 : i32
    %c0_i32_1 = arith.constant 0 : i32
    return %c0_i32, %c0_i32_0 : i32, i32
  }
  func.func @transform_10(%arg0: i32) -> (i32, i32) {
    %c0_i32 = arith.constant 0 : i32
    %c0_i32_0 = arith.constant 0 : i32
    %c0_i32_1 = arith.constant 0 : i32
    return %c0_i32, %c0_i32_0 : i32, i32
  }
  func.func @transform_11(%arg0: i32) -> (i32, i32) {
    %c0_i32 = arith.constant 0 : i32
    %c0_i32_0 = arith.constant 0 : i32
    %c0_i32_1 = arith.constant 0 : i32
    return %c0_i32, %c0_i32_0 : i32, i32
  }
  func.func @transform_12(%arg0: i32) -> (i32, i32) {
    %c0_i32 = arith.constant 0 : i32
    %c0_i32_0 = arith.constant 0 : i32
    %c0_i32_1 = arith.constant 0 : i32
    return %c0_i32, %c0_i32_0 : i32, i32
  }
  func.func @transform_13(%arg0: i32) -> (i32, i32) {
    %c0_i32 = arith.constant 0 : i32
    %c0_i32_0 = arith.constant 0 : i32
    return %arg0, %c0_i32 : i32, i32
  }
}

</mosaic_0001>

<llo_original>
// kernel: tpu_custom_call.1
$region0: #{tpu_custom_call.1}
  #allocation0 [shape = 'u32[]', space=smem, size = 0x4, offset = 0x4, fixed_abs, tag = 'smem constant byte address 0x4 - core index']
  #allocation1 [shape = 'u32[144,128]{1,0:T(1,128)}', space=vmem, size = 0x12000, scoped, tag = 'internal scratch']
  %s0 = inlined_call_operand.hbm [shape: f32[8,128], index: 0, kind: input, shape index: {}]
  %s1 = inlined_call_operand.vmem [shape: bf16[128,64], index: 1, kind: input, shape index: {}]
  %s2 = inlined_call_operand.vmem [shape: f32[1,64], index: 2, kind: input, shape index: {}]
  %s3 = inlined_call_operand.vmem [shape: bf16[64,64], index: 3, kind: input, shape index: {}]
  %s4 = inlined_call_operand.vmem [shape: f32[1,64], index: 4, kind: input, shape index: {}]
  %s5 = inlined_call_operand.vmem [shape: bf16[64,64], index: 5, kind: input, shape index: {}]
  %s6 = inlined_call_operand.hbm [shape: f32[1,64], index: 6, kind: input, shape index: {}]
  %s7 = inlined_call_operand.vmem [shape: bf16[64,64], index: 7, kind: input, shape index: {}]
  %s8 = inlined_call_operand.hbm [shape: f32[1,64], index: 8, kind: input, shape index: {}]
  %s9 = inlined_call_operand.vmem [shape: bf16[64,64], index: 9, kind: input, shape index: {}]
  %s10 = inlined_call_operand.vmem [shape: f32[1,64], index: 10, kind: input, shape index: {}]
  %s11 = inlined_call_operand.hbm [shape: bf16[64,128], index: 11, kind: input, shape index: {}]
  %s12 = inlined_call_operand.vmem [shape: f32[1,128], index: 12, kind: input, shape index: {}]
  %s13 = inlined_call_operand.hbm [shape: bf16[8,128], index: 13, kind: output, shape index: {}]
  %s14 = sld [smem:[#allocation0]]
  $region78: #{tpu_custom_call.1} parent=0
    _
  %s16 = ssub.s32 1, %s14
  %s17 = scalar_select 0, %s16, %s14
  $region1: #{tpu_custom_call.1} parent=0
    #allocation2 [shape = 'u8[4096]{0}', space=vmem, size = 0x1000, scoped, tag = 'input window, operand 0, single buffered']
    #allocation3 [shape = 's32[1]{0}', space=sflag, size = 0x4, scoped, tag = 'scoped memory for tpu_custom_call.1']
    #allocation4 [shape = 's32[1]{0}', space=sflag, size = 0x4, scoped, tag = 'scoped memory for tpu_custom_call.1']
    #allocation5 [shape = 'u8[512]{0}', space=vmem, size = 0x400, scoped, tag = 'input window, operand 6, single buffered']
    #allocation6 [shape = 's32[1]{0}', space=sflag, size = 0x4, scoped, tag = 'scoped memory for tpu_custom_call.1']
    #allocation7 [shape = 'u8[512]{0}', space=vmem, size = 0x400, scoped, tag = 'input window, operand 8, single buffered']
    #allocation8 [shape = 'u8[16384]{0}', space=vmem, size = 0x4000, scoped, tag = 'input window, operand 11, single buffered']
    #allocation9 [shape = 's32[1]{0}', space=sflag, size = 0x4, scoped, tag = 'scoped memory for tpu_custom_call.1']
    #allocation10 [shape = 'u8[2048]{0}', space=vmem, size = 0x800, scoped, tag = 'output window, operand 0, single buffered']
    %18 = vsyncpa [#allocation3], 0
    %19 = vsyncpa [#allocation6], 0
    %20 = vsyncpa [#allocation9], 0
    %21 = vsyncpa [#allocation4], 0
    // Predicated region
    $region2: #{tpu_custom_call.1} parent=1 // pred_check
      _
    $region3: #{tpu_custom_call.1} parent=1 // pred_check_branch
      %23 = sbr.rel (0) target = $region5
    $region4: #{tpu_custom_call.1} parent=1 // pred_region
      %s25 = ssub.s32 128, 128
      %26 = vsyncadd [#allocation3], %s25
      %s28 = sshll.u32 [#allocation2], 4
      %s29 = int_to_ptr.vmem [resolvable:$true] %s28
      %31 = dma.hbm_to_vmem [thread:$0]  %s0, 128, %s29, [#allocation3]
    $region5: #{tpu_custom_call.1} parent=1 // pred_fallthru
      _
    // Predicated region
    $region6: #{tpu_custom_call.1} parent=1 // pred_check
      _
    $region7: #{tpu_custom_call.1} parent=1 // pred_check_branch
      %33 = sbr.rel (0) target = $region9
    $region8: #{tpu_custom_call.1} parent=1 // pred_region
      _
    $region9: #{tpu_custom_call.1} parent=1 // pred_fallthru
      _
    // Predicated region
    $region10: #{tpu_custom_call.1} parent=1 // pred_check
      _
    $region11: #{tpu_custom_call.1} parent=1 // pred_check_branch
      %35 = sbr.rel (0) target = $region13
    $region12: #{tpu_custom_call.1} parent=1 // pred_region
      _
    $region13: #{tpu_custom_call.1} parent=1 // pred_fallthru
      _
    // Predicated region
    $region14: #{tpu_custom_call.1} parent=1 // pred_check
      _
    $region15: #{tpu_custom_call.1} parent=1 // pred_check_branch
      %37 = sbr.rel (0) target = $region17
    $region16: #{tpu_custom_call.1} parent=1 // pred_region
      _
    $region17: #{tpu_custom_call.1} parent=1 // pred_fallthru
      _
    // Predicated region
    $region18: #{tpu_custom_call.1} parent=1 // pred_check
      _
    $region19: #{tpu_custom_call.1} parent=1 // pred_check_branch
      %39 = sbr.rel (0) target = $region21
    $region20: #{tpu_custom_call.1} parent=1 // pred_region
      _
    $region21: #{tpu_custom_call.1} parent=1 // pred_fallthru
      _
    // Predicated region
    $region22: #{tpu_custom_call.1} parent=1 // pred_check
      _
    $region23: #{tpu_custom_call.1} parent=1 // pred_check_branch
      %41 = sbr.rel (0) target = $region25
    $region24: #{tpu_custom_call.1} parent=1 // pred_region
      _
    $region25: #{tpu_custom_call.1} parent=1 // pred_fallthru
      _
    // Predicated region
    $region26: #{tpu_custom_call.1} parent=1 // pred_check
      _
    $region27: #{tpu_custom_call.1} parent=1 // pred_check_branch
      %43 = sbr.rel (0) target = $region29
    $region28: #{tpu_custom_call.1} parent=1 // pred_region
      %s45 = ssub.s32 16, 16
      %46 = vsyncadd [#allocation6], %s45
      %s48 = sshll.u32 [#allocation5], 4
      %s49 = int_to_ptr.vmem [resolvable:$true] %s48
      %51 = dma.hbm_to_vmem [thread:$0]  %s6, 16, %s49, [#allocation6]
    $region29: #{tpu_custom_call.1} parent=1 // pred_fallthru
      _
    // Predicated region
    $region30: #{tpu_custom_call.1} parent=1 // pred_check
      _
    $region31: #{tpu_custom_call.1} parent=1 // pred_check_branch
      %53 = sbr.rel (0) target = $region33
    $region32: #{tpu_custom_call.1} parent=1 // pred_region
      _
    $region33: #{tpu_custom_call.1} parent=1 // pred_fallthru
      _
    // Predicated region
    $region34: #{tpu_custom_call.1} parent=1 // pred_check
      _
    $region35: #{tpu_custom_call.1} parent=1 // pred_check_branch
      %55 = sbr.rel (0) target = $region37
    $region36: #{tpu_custom_call.1} parent=1 // pred_region
      %s57 = ssub.s32 16, 16
      %58 = vsyncadd [#allocation6], %s57
      %s60 = sshll.u32 [#allocation7], 4
      %s61 = int_to_ptr.vmem [resolvable:$true] %s60
      %63 = dma.hbm_to_vmem [thread:$0]  %s8, 16, %s61, [#allocation6]
    $region37: #{tpu_custom_call.1} parent=1 // pred_fallthru
      _
    // Predicated region
    $region38: #{tpu_custom_call.1} parent=1 // pred_check
      _
    $region39: #{tpu_custom_call.1} parent=1 // pred_check_branch
      %65 = sbr.rel (0) target = $region41
    $region40: #{tpu_custom_call.1} parent=1 // pred_region
      _
    $region41: #{tpu_custom_call.1} parent=1 // pred_fallthru
      _
    // Predicated region
    $region42: #{tpu_custom_call.1} parent=1 // pred_check
      _
    $region43: #{tpu_custom_call.1} parent=1 // pred_check_branch
      %67 = sbr.rel (0) target = $region45
    $region44: #{tpu_custom_call.1} parent=1 // pred_region
      _
    $region45: #{tpu_custom_call.1} parent=1 // pred_fallthru
      _
    // Predicated region
    $region46: #{tpu_custom_call.1} parent=1 // pred_check
      _
    $region47: #{tpu_custom_call.1} parent=1 // pred_check_branch
      %69 = sbr.rel (0) target = $region49
    $region48: #{tpu_custom_call.1} parent=1 // pred_region
      %s71 = ssub.s32 512, 512
      %72 = vsyncadd [#allocation9], %s71
      %s73 = sshll.u32 [#allocation8], 4
      %s74 = int_to_ptr.vmem [resolvable:$true] %s73
      %79 = dma.hbm_to_vmem [thread:$0]  %s11, 512, %s74, [#allocation9], 64, 64, 4
    $region49: #{tpu_custom_call.1} parent=1 // pred_fallthru
      _
    // Predicated region
    $region50: #{tpu_custom_call.1} parent=1 // pred_check
      _
    $region51: #{tpu_custom_call.1} parent=1 // pred_check_branch
      %81 = sbr.rel (0) target = $region53
    $region52: #{tpu_custom_call.1} parent=1 // pred_region
      _
    $region53: #{tpu_custom_call.1} parent=1 // pred_fallthru
      _
    // Predicated region
    $region54: #{tpu_custom_call.1} parent=1 // pred_check
      _
    $region55: #{tpu_custom_call.1} parent=1 // pred_check_branch
      %83 = sbr.rel (0) target = $region57
    $region56: #{tpu_custom_call.1} parent=1 // pred_region
      %84 = dma.done [#allocation3], 128
    $region57: #{tpu_custom_call.1} parent=1 // pred_fallthru
      _
    // Predicated region
    $region58: #{tpu_custom_call.1} parent=1 // pred_check
      _
    $region59: #{tpu_custom_call.1} parent=1 // pred_check_branch
      %86 = sbr.rel (0) target = $region61
    $region60: #{tpu_custom_call.1} parent=1 // pred_region
      %87 = dma.done [#allocation6], 16
    $region61: #{tpu_custom_call.1} parent=1 // pred_fallthru
      _
    // Predicated region
    $region62: #{tpu_custom_call.1} parent=1 // pred_check
      _
    $region63: #{tpu_custom_call.1} parent=1 // pred_check_branch
      %89 = sbr.rel (0) target = $region65
    $region64: #{tpu_custom_call.1} parent=1 // pred_region
      %90 = dma.done [#allocation6], 16
    $region65: #{tpu_custom_call.1} parent=1 // pred_fallthru
      _
    // Predicated region
    $region66: #{tpu_custom_call.1} parent=1 // pred_check
      _
    $region67: #{tpu_custom_call.1} parent=1 // pred_check_branch
      %92 = sbr.rel (0) target = $region69
    $region68: #{tpu_custom_call.1} parent=1 // pred_region
      %93 = dma.done [#allocation9], 512
    $region69: #{tpu_custom_call.1} parent=1 // pred_fallthru
      _
    %v95 = vld [vmem:[#allocation2] sm:$0xff]
    %v96 = vpack.c.bf16 %v95, %v95
    %v97 = vld [vmem:[%s1] sm:$0xf]
    %v98 = vld [vmem:[%s1 + $0x4] sm:$0xf]
    %v99 = vld [vmem:[%s1 + $0x8] sm:$0xf]
    %v100 = vld [vmem:[%s1 + $0xc] sm:$0xf]
    %v101 = vld [vmem:[%s1 + $0x10] sm:$0xf]
    %v102 = vld [vmem:[%s1 + $0x14] sm:$0xf]
    %v103 = vld [vmem:[%s1 + $0x18] sm:$0xf]
    %v104 = vld [vmem:[%s1 + $0x1c] sm:$0xf]
    %v105 = vld [vmem:[%s1 + $0x20] sm:$0xf]
    %v106 = vld [vmem:[%s1 + $0x24] sm:$0xf]
    %v107 = vld [vmem:[%s1 + $0x28] sm:$0xf]
    %v108 = vld [vmem:[%s1 + $0x2c] sm:$0xf]
    %v109 = vld [vmem:[%s1 + $0x30] sm:$0xf]
    %v110 = vld [vmem:[%s1 + $0x34] sm:$0xf]
    %v111 = vld [vmem:[%s1 + $0x38] sm:$0xf]
    %v112 = vld [vmem:[%s1 + $0x3c] sm:$0xf]
    %v113 = vld [vmem:[%s2] sm:$0x1]
    %v115 = vlaneseq
    %v116 = vshrl.u32 %v115, 7
    %v117 = vsub.s32 0, %v116
    %v118 = vrot.slane %v113, %v117
    %v136 = vunpack.c.l.b16 %v97
    %v137 = vunpack.c.l.b16 %v98
    %v138 = vunpack.c.l.b16 %v99
    %v139 = vunpack.c.l.b16 %v100
    %v140 = vunpack.c.l.b16 %v101
    %v141 = vunpack.c.l.b16 %v102
    %v142 = vunpack.c.l.b16 %v103
    %v143 = vunpack.c.l.b16 %v104
    %v144 = vunpack.c.l.b16 %v105
    %v145 = vunpack.c.l.b16 %v106
    %v146 = vunpack.c.l.b16 %v107
    %v147 = vunpack.c.l.b16 %v108
    %v148 = vunpack.c.l.b16 %v109
    %v149 = vunpack.c.l.b16 %v110
    %v150 = vunpack.c.l.b16 %v111
    %v151 = vunpack.c.l.b16 %v112
    %v152 = vpack.c.b16 %v137, %v136
    %v153 = vpack.c.b16 %v139, %v138
    %v154 = vpack.c.b16 %v141, %v140
    %v155 = vpack.c.b16 %v143, %v142
    %v156 = vpack.c.b16 %v145, %v144
    %v157 = vpack.c.b16 %v147, %v146
    %v158 = vpack.c.b16 %v149, %v148
    %v159 = vpack.c.b16 %v151, %v150
    %168 = vmatprep.subr.bf16.mxu0 0
    %169 = vmatpush1.bf16.msra.mxu0 %v152
    %170 = vmatprep.subr.bf16.mxu0 0
    %171 = vmatpush1.bf16.msra.mxu0 %v153
    %172 = vmatprep.subr.bf16.mxu0 0
    %173 = vmatpush1.bf16.msra.mxu0 %v154
    %174 = vmatprep.subr.bf16.mxu0 0
    %175 = vmatpush1.bf16.msra.mxu0 %v155
    %176 = vmatprep.subr.bf16.mxu0 0
    %177 = vmatpush1.bf16.msra.mxu0 %v156
    %178 = vmatprep.subr.bf16.mxu0 0
    %179 = vmatpush1.bf16.msra.mxu0 %v157
    %180 = vmatprep.subr.bf16.mxu0 0
    %181 = vmatpush1.bf16.msra.mxu0 %v158
    %182 = vmatprep.subr.bf16.mxu0 0
    %183 = vmatpush1.bf16.msra.mxu0 %v159
    %184 = vmatprep.subr.bf16.mxu0 0
    %185 = vmatpush1.bf16.msra.mxu0 0
    %186 = vmatprep.subr.bf16.mxu0 0
    %187 = vmatpush1.bf16.msra.mxu0 0
    %188 = vmatprep.subr.bf16.mxu0 0
    %189 = vmatpush1.bf16.msra.mxu0 0
    %190 = vmatprep.subr.bf16.mxu0 0
    %191 = vmatpush1.bf16.msra.mxu0 0
    %192 = vmatprep.subr.bf16.mxu0 0
    %193 = vmatpush1.bf16.msra.mxu0 0
    %194 = vmatprep.subr.bf16.mxu0 0
    %195 = vmatpush1.bf16.msra.mxu0 0
    %196 = vmatprep.subr.bf16.mxu0 0
    %197 = vmatpush1.bf16.msra.mxu0 0
    %198 = vmatprep.subr.bf16.mxu0 0
    %199 = vmatpush1.bf16.msra.mxu0 0
    %200 = vmatprep.mubr.bf16.mxu0 0
    %201 = vmatmul.mubr.bf16.gmra.mrb[0].mxu0 %v96
    %v202 = vpop.f32.mrb[0].mxu0
    %v203 = vadd.f32 %v118, %v202
    %v204 = vpop.f32.mrb[0].mxu0
    %v205 = vpop.f32.mrb[0].mxu0
    %v206 = vpop.f32.mrb[0].mxu0
    %207 = vdwg.mxu0
    %v208 = vmax.f32 %v203, 0.0
    %v209 = vpack.c.bf16 %v208, %v208
    %v210 = vld [vmem:[%s3] sm:$0xf]
    %v211 = vld [vmem:[%s3 + $0x4] sm:$0xf]
    %v212 = vld [vmem:[%s3 + $0x8] sm:$0xf]
    %v213 = vld [vmem:[%s3 + $0xc] sm:$0xf]
    %v214 = vld [vmem:[%s3 + $0x10] sm:$0xf]
    %v215 = vld [vmem:[%s3 + $0x14] sm:$0xf]
    %v216 = vld [vmem:[%s3 + $0x18] sm:$0xf]
    %v217 = vld [vmem:[%s3 + $0x1c] sm:$0xf]
    %v218 = vld [vmem:[%s4] sm:$0x1]
    %v220 = vlaneseq
    %v221 = vshrl.u32 %v220, 7
    %v222 = vsub.s32 0, %v221
    %v223 = vrot.slane %v218, %v222
    %v233 = vunpack.c.l.b16 %v210
    %v234 = vunpack.c.l.b16 %v211
    %v235 = vunpack.c.l.b16 %v212
    %v236 = vunpack.c.l.b16 %v213
    %v237 = vunpack.c.l.b16 %v214
    %v238 = vunpack.c.l.b16 %v215
    %v239 = vunpack.c.l.b16 %v216
    %v240 = vunpack.c.l.b16 %v217
    %v241 = vpack.c.b16 %v234, %v233
    %v242 = vpack.c.b16 %v236, %v235
    %v243 = vpack.c.b16 %v238, %v237
    %v244 = vpack.c.b16 %v240, %v239
    %vm249 = vcmask 523264
    %v251 = vsel %vm249, %v209, 0
    %253 = vmatprep.subr.bf16.mxu0 0
    %254 = vmatpush1.bf16.msra.mxu0 %v241
    %255 = vmatprep.subr.bf16.mxu0 0
    %256 = vmatpush1.bf16.msra.mxu0 %v242
    %257 = vmatprep.subr.bf16.mxu0 0
    %258 = vmatpush1.bf16.msra.mxu0 %v243
    %259 = vmatprep.subr.bf16.mxu0 0
    %260 = vmatpush1.bf16.msra.mxu0 %v244
    %261 = vmatprep.subr.bf16.mxu0 0
    %262 = vmatpush1.bf16.msra.mxu0 0
    %263 = vmatprep.subr.bf16.mxu0 0
    %264 = vmatpush1.bf16.msra.mxu0 0
    %265 = vmatprep.subr.bf16.mxu0 0
    %266 = vmatpush1.bf16.msra.mxu0 0
    %267 = vmatprep.subr.bf16.mxu0 0
    %268 = vmatpush1.bf16.msra.mxu0 0
    %269 = vmatprep.subr.bf16.mxu0 0
    %270 = vmatpush1.bf16.msra.mxu0 0
    %271 = vmatprep.subr.bf16.mxu0 0
    %272 = vmatpush1.bf16.msra.mxu0 0
    %273 = vmatprep.subr.bf16.mxu0 0
    %274 = vmatpush1.bf16.msra.mxu0 0
    %275 = vmatprep.subr.bf16.mxu0 0
    %276 = vmatpush1.bf16.msra.mxu0 0
    %277 = vmatprep.subr.bf16.mxu0 0
    %278 = vmatpush1.bf16.msra.mxu0 0
    %279 = vmatprep.subr.bf16.mxu0 0
    %280 = vmatpush1.bf16.msra.mxu0 0
    %281 = vmatprep.subr.bf16.mxu0 0
    %282 = vmatpush1.bf16.msra.mxu0 0
    %283 = vmatprep.subr.bf16.mxu0 0
    %284 = vmatpush1.bf16.msra.mxu0 0
    %285 = vmatprep.mubr.bf16.mxu0 0
    %286 = vmatmul.mubr.bf16.gmra.mrb[0].mxu0 %v251
    %v287 = vpop.f32.mrb[0].mxu0
    %v288 = vadd.f32 %v223, %v287
    %v289 = vpop.f32.mrb[0].mxu0
    %v290 = vpop.f32.mrb[0].mxu0
    %v291 = vpop.f32.mrb[0].mxu0
    %292 = vdwg.mxu0
    %v293 = vmax.f32 %v288, 0.0
    %v294 = vpack.c.bf16 %v293, %v293
    %v295 = vld [vmem:[%s5] sm:$0xf]
    %v296 = vld [vmem:[%s5 + $0x4] sm:$0xf]
    %v297 = vld [vmem:[%s5 + $0x8] sm:$0xf]
    %v298 = vld [vmem:[%s5 + $0xc] sm:$0xf]
    %v299 = vld [vmem:[%s5 + $0x10] sm:$0xf]
    %v300 = vld [vmem:[%s5 + $0x14] sm:$0xf]
    %v301 = vld [vmem:[%s5 + $0x18] sm:$0xf]
    %v302 = vld [vmem:[%s5 + $0x1c] sm:$0xf]
    %v303 = vld [vmem:[#allocation5] sm:$0x1]
    %v305 = vlaneseq
    %v306 = vshrl.u32 %v305, 7
    %v307 = vsub.s32 0, %v306
    %v308 = vrot.slane %v303, %v307
    %v318 = vunpack.c.l.b16 %v295
    %v319 = vunpack.c.l.b16 %v296
    %v320 = vunpack.c.l.b16 %v297
    %v321 = vunpack.c.l.b16 %v298
    %v322 = vunpack.c.l.b16 %v299
    %v323 = vunpack.c.l.b16 %v300
    %v324 = vunpack.c.l.b16 %v301
    %v325 = vunpack.c.l.b16 %v302
    %v326 = vpack.c.b16 %v319, %v318
    %v327 = vpack.c.b16 %v321, %v320
    %v328 = vpack.c.b16 %v323, %v322
    %v329 = vpack.c.b16 %v325, %v324
    %v335 = vsel %vm249, %v294, 0
    %337 = vmatprep.subr.bf16.mxu0 0
    %338 = vmatpush1.bf16.msra.mxu0 %v326
    %339 = vmatprep.subr.bf16.mxu0 0
    %340 = vmatpush1.bf16.msra.mxu0 %v327
    %341 = vmatprep.subr.bf16.mxu0 0
    %342 = vmatpush1.bf16.msra.mxu0 %v328
    %343 = vmatprep.subr.bf16.mxu0 0
    %344 = vmatpush1.bf16.msra.mxu0 %v329
    %345 = vmatprep.subr.bf16.mxu0 0
    %346 = vmatpush1.bf16.msra.mxu0 0
    %347 = vmatprep.subr.bf16.mxu0 0
    %348 = vmatpush1.bf16.msra.mxu0 0
    %349 = vmatprep.subr.bf16.mxu0 0
    %350 = vmatpush1.bf16.msra.mxu0 0
    %351 = vmatprep.subr.bf16.mxu0 0
    %352 = vmatpush1.bf16.msra.mxu0 0
    %353 = vmatprep.subr.bf16.mxu0 0
    %354 = vmatpush1.bf16.msra.mxu0 0
    %355 = vmatprep.subr.bf16.mxu0 0
    %356 = vmatpush1.bf16.msra.mxu0 0
    %357 = vmatprep.subr.bf16.mxu0 0
    %358 = vmatpush1.bf16.msra.mxu0 0
    %359 = vmatprep.subr.bf16.mxu0 0
    %360 = vmatpush1.bf16.msra.mxu0 0
    %361 = vmatprep.subr.bf16.mxu0 0
    %362 = vmatpush1.bf16.msra.mxu0 0
    %363 = vmatprep.subr.bf16.mxu0 0
    %364 = vmatpush1.bf16.msra.mxu0 0
    %365 = vmatprep.subr.bf16.mxu0 0
    %366 = vmatpush1.bf16.msra.mxu0 0
    %367 = vmatprep.subr.bf16.mxu0 0
    %368 = vmatpush1.bf16.msra.mxu0 0
    %369 = vmatprep.mubr.bf16.mxu0 0
    %370 = vmatmul.mubr.bf16.gmra.mrb[0].mxu0 %v335
    %v371 = vpop.f32.mrb[0].mxu0
    %v372 = vadd.f32 %v308, %v371
    %v373 = vpop.f32.mrb[0].mxu0
    %v374 = vpop.f32.mrb[0].mxu0
    %v375 = vpop.f32.mrb[0].mxu0
    %376 = vdwg.mxu0
    %v377 = vmax.f32 %v372, 0.0
    %v378 = vpack.c.bf16 %v377, %v377
    %v379 = vld [vmem:[%s7] sm:$0xf]
    %v380 = vld [vmem:[%s7 + $0x4] sm:$0xf]
    %v381 = vld [vmem:[%s7 + $0x8] sm:$0xf]
    %v382 = vld [vmem:[%s7 + $0xc] sm:$0xf]
    %v383 = vld [vmem:[%s7 + $0x10] sm:$0xf]
    %v384 = vld [vmem:[%s7 + $0x14] sm:$0xf]
    %v385 = vld [vmem:[%s7 + $0x18] sm:$0xf]
    %v386 = vld [vmem:[%s7 + $0x1c] sm:$0xf]
    %v387 = vld [vmem:[#allocation7] sm:$0x1]
    %v389 = vlaneseq
    %v390 = vshrl.u32 %v389, 7
    %v391 = vsub.s32 0, %v390
    %v392 = vrot.slane %v387, %v391
    %v402 = vunpack.c.l.b16 %v379
    %v403 = vunpack.c.l.b16 %v380
    %v404 = vunpack.c.l.b16 %v381
    %v405 = vunpack.c.l.b16 %v382
    %v406 = vunpack.c.l.b16 %v383
    %v407 = vunpack.c.l.b16 %v384
    %v408 = vunpack.c.l.b16 %v385
    %v409 = vunpack.c.l.b16 %v386
    %v410 = vpack.c.b16 %v403, %v402
    %v411 = vpack.c.b16 %v405, %v404
    %v412 = vpack.c.b16 %v407, %v406
    %v413 = vpack.c.b16 %v409, %v408
    %v419 = vsel %vm249, %v378, 0
    %421 = vmatprep.subr.bf16.mxu0 0
    %422 = vmatpush1.bf16.msra.mxu0 %v410
    %423 = vmatprep.subr.bf16.mxu0 0
    %424 = vmatpush1.bf16.msra.mxu0 %v411
    %425 = vmatprep.subr.bf16.mxu0 0
    %426 = vmatpush1.bf16.msra.mxu0 %v412
    %427 = vmatprep.subr.bf16.mxu0 0
    %428 = vmatpush1.bf16.msra.mxu0 %v413
    %429 = vmatprep.subr.bf16.mxu0 0
    %430 = vmatpush1.bf16.msra.mxu0 0
    %431 = vmatprep.subr.bf16.mxu0 0
    %432 = vmatpush1.bf16.msra.mxu0 0
    %433 = vmatprep.subr.bf16.mxu0 0
    %434 = vmatpush1.bf16.msra.mxu0 0
    %435 = vmatprep.subr.bf16.mxu0 0
    %436 = vmatpush1.bf16.msra.mxu0 0
    %437 = vmatprep.subr.bf16.mxu0 0
    %438 = vmatpush1.bf16.msra.mxu0 0
    %439 = vmatprep.subr.bf16.mxu0 0
    %440 = vmatpush1.bf16.msra.mxu0 0
    %441 = vmatprep.subr.bf16.mxu0 0
    %442 = vmatpush1.bf16.msra.mxu0 0
    %443 = vmatprep.subr.bf16.mxu0 0
    %444 = vmatpush1.bf16.msra.mxu0 0
    %445 = vmatprep.subr.bf16.mxu0 0
    %446 = vmatpush1.bf16.msra.mxu0 0
    %447 = vmatprep.subr.bf16.mxu0 0
    %448 = vmatpush1.bf16.msra.mxu0 0
    %449 = vmatprep.subr.bf16.mxu0 0
    %450 = vmatpush1.bf16.msra.mxu0 0
    %451 = vmatprep.subr.bf16.mxu0 0
    %452 = vmatpush1.bf16.msra.mxu0 0
    %453 = vmatprep.mubr.bf16.mxu0 0
    %454 = vmatmul.mubr.bf16.gmra.mrb[0].mxu0 %v419
    %v455 = vpop.f32.mrb[0].mxu0
    %v456 = vadd.f32 %v392, %v455
    %v457 = vpop.f32.mrb[0].mxu0
    %v458 = vpop.f32.mrb[0].mxu0
    %v459 = vpop.f32.mrb[0].mxu0
    %460 = vdwg.mxu0
    %v461 = vmax.f32 %v456, 0.0
    %v462 = vpack.c.bf16 %v461, %v461
    %v463 = vld [vmem:[%s9] sm:$0xf]
    %v464 = vld [vmem:[%s9 + $0x4] sm:$0xf]
    %v465 = vld [vmem:[%s9 + $0x8] sm:$0xf]
    %v466 = vld [vmem:[%s9 + $0xc] sm:$0xf]
    %v467 = vld [vmem:[%s9 + $0x10] sm:$0xf]
    %v468 = vld [vmem:[%s9 + $0x14] sm:$0xf]
    %v469 = vld [vmem:[%s9 + $0x18] sm:$0xf]
    %v470 = vld [vmem:[%s9 + $0x1c] sm:$0xf]
    %v471 = vld [vmem:[%s10] sm:$0x1]
    %v473 = vlaneseq
    %v474 = vshrl.u32 %v473, 7
    %v475 = vsub.s32 0, %v474
    %v476 = vrot.slane %v471, %v475
    %v486 = vunpack.c.l.b16 %v463
    %v487 = vunpack.c.l.b16 %v464
    %v488 = vunpack.c.l.b16 %v465
    %v489 = vunpack.c.l.b16 %v466
    %v490 = vunpack.c.l.b16 %v467
    %v491 = vunpack.c.l.b16 %v468
    %v492 = vunpack.c.l.b16 %v469
    %v493 = vunpack.c.l.b16 %v470
    %v494 = vpack.c.b16 %v487, %v486
    %v495 = vpack.c.b16 %v489, %v488
    %v496 = vpack.c.b16 %v491, %v490
    %v497 = vpack.c.b16 %v493, %v492
    %v503 = vsel %vm249, %v462, 0
    %505 = vmatprep.subr.bf16.mxu0 0
    %506 = vmatpush1.bf16.msra.mxu0 %v494
    %507 = vmatprep.subr.bf16.mxu0 0
    %508 = vmatpush1.bf16.msra.mxu0 %v495
    %509 = vmatprep.subr.bf16.mxu0 0
    %510 = vmatpush1.bf16.msra.mxu0 %v496
    %511 = vmatprep.subr.bf16.mxu0 0
    %512 = vmatpush1.bf16.msra.mxu0 %v497
    %513 = vmatprep.subr.bf16.mxu0 0
    %514 = vmatpush1.bf16.msra.mxu0 0
    %515 = vmatprep.subr.bf16.mxu0 0
    %516 = vmatpush1.bf16.msra.mxu0 0
    %517 = vmatprep.subr.bf16.mxu0 0
    %518 = vmatpush1.bf16.msra.mxu0 0
    %519 = vmatprep.subr.bf16.mxu0 0
    %520 = vmatpush1.bf16.msra.mxu0 0
    %521 = vmatprep.subr.bf16.mxu0 0
    %522 = vmatpush1.bf16.msra.mxu0 0
    %523 = vmatprep.subr.bf16.mxu0 0
    %524 = vmatpush1.bf16.msra.mxu0 0
    %525 = vmatprep.subr.bf16.mxu0 0
    %526 = vmatpush1.bf16.msra.mxu0 0
    %527 = vmatprep.subr.bf16.mxu0 0
    %528 = vmatpush1.bf16.msra.mxu0 0
    %529 = vmatprep.subr.bf16.mxu0 0
    %530 = vmatpush1.bf16.msra.mxu0 0
    %531 = vmatprep.subr.bf16.mxu0 0
    %532 = vmatpush1.bf16.msra.mxu0 0
    %533 = vmatprep.subr.bf16.mxu0 0
    %534 = vmatpush1.bf16.msra.mxu0 0
    %535 = vmatprep.subr.bf16.mxu0 0
    %536 = vmatpush1.bf16.msra.mxu0 0
    %537 = vmatprep.mubr.bf16.mxu0 0
    %538 = vmatmul.mubr.bf16.gmra.mrb[0].mxu0 %v503
    %v539 = vpop.f32.mrb[0].mxu0
    %v540 = vadd.f32 %v476, %v539
    %v541 = vpop.f32.mrb[0].mxu0
    %v542 = vpop.f32.mrb[0].mxu0
    %v543 = vpop.f32.mrb[0].mxu0
    %544 = vdwg.mxu0
    %v545 = vmax.f32 %v540, 0.0
    %v546 = vpack.c.bf16 %v545, %v545
    %v547 = vld [vmem:[#allocation8] sm:$0xf]
    %v548 = vld [vmem:[#allocation8 + $0x4] sm:$0xf]
    %v549 = vld [vmem:[#allocation8 + $0x8] sm:$0xf]
    %v550 = vld [vmem:[#allocation8 + $0xc] sm:$0xf]
    %v551 = vld [vmem:[#allocation8 + $0x10] sm:$0xf]
    %v552 = vld [vmem:[#allocation8 + $0x14] sm:$0xf]
    %v553 = vld [vmem:[#allocation8 + $0x18] sm:$0xf]
    %v554 = vld [vmem:[#allocation8 + $0x1c] sm:$0xf]
    %v555 = vld [vmem:[%s12] sm:$0x1]
    %v557 = vlaneseq
    %v558 = vshrl.u32 %v557, 7
    %v559 = vsub.s32 0, %v558
    %v560 = vrot.slane %v555, %v559
    %v570 = vunpack.c.l.b16 %v547
    %v571 = vunpack.c.l.b16 %v548
    %v572 = vunpack.c.l.b16 %v549
    %v573 = vunpack.c.l.b16 %v550
    %v574 = vunpack.c.l.b16 %v551
    %v575 = vunpack.c.l.b16 %v552
    %v576 = vunpack.c.l.b16 %v553
    %v577 = vunpack.c.l.b16 %v554
    %v578 = vpack.c.b16 %v571, %v570
    %v579 = vpack.c.b16 %v573, %v572
    %v580 = vpack.c.b16 %v575, %v574
    %v581 = vpack.c.b16 %v577, %v576
    %v587 = vsel %vm249, %v546, 0
    %589 = vmatprep.subr.bf16.mxu0 0
    %590 = vmatpush1.bf16.msra.mxu0 %v578
    %591 = vmatprep.subr.bf16.mxu0 0
    %592 = vmatpush1.bf16.msra.mxu0 %v579
    %593 = vmatprep.subr.bf16.mxu0 0
    %594 = vmatpush1.bf16.msra.mxu0 %v580
    %595 = vmatprep.subr.bf16.mxu0 0
    %596 = vmatpush1.bf16.msra.mxu0 %v581
    %597 = vmatprep.subr.bf16.mxu0 0
    %598 = vmatpush1.bf16.msra.mxu0 0
    %599 = vmatprep.subr.bf16.mxu0 0
    %600 = vmatpush1.bf16.msra.mxu0 0
    %601 = vmatprep.subr.bf16.mxu0 0
    %602 = vmatpush1.bf16.msra.mxu0 0
    %603 = vmatprep.subr.bf16.mxu0 0
    %604 = vmatpush1.bf16.msra.mxu0 0
    %605 = vmatprep.subr.bf16.mxu0 0
    %606 = vmatpush1.bf16.msra.mxu0 0
    %607 = vmatprep.subr.bf16.mxu0 0
    %608 = vmatpush1.bf16.msra.mxu0 0
    %609 = vmatprep.subr.bf16.mxu0 0
    %610 = vmatpush1.bf16.msra.mxu0 0
    %611 = vmatprep.subr.bf16.mxu0 0
    %612 = vmatpush1.bf16.msra.mxu0 0
    %613 = vmatprep.subr.bf16.mxu0 0
    %614 = vmatpush1.bf16.msra.mxu0 0
    %615 = vmatprep.subr.bf16.mxu0 0
    %616 = vmatpush1.bf16.msra.mxu0 0
    %617 = vmatprep.subr.bf16.mxu0 0
    %618 = vmatpush1.bf16.msra.mxu0 0
    %619 = vmatprep.subr.bf16.mxu0 0
    %620 = vmatpush1.bf16.msra.mxu0 0
    %621 = vmatprep.mubr.bf16.mxu0 0
    %622 = vmatmul.mubr.bf16.gmra.mrb[0].mxu0 %v587
    %v623 = vpop.f32.mrb[0].mxu0
    %v624 = vadd.f32 %v560, %v623
    %v625 = vpop.f32.mrb[0].mxu0
    %v626 = vpop.f32.mrb[0].mxu0
    %v627 = vpop.f32.mrb[0].mxu0
    %628 = vdwg.mxu0
    %v629 = vmax.f32 %v624, 0.0
    %v630 = vpack.c.bf16 %v629, %v629
    %631 = vst [vmem:[#allocation10] sm:$0xf] %v630
    // Predicated region
    $region70: #{tpu_custom_call.1} parent=1 // pred_check
      _
    $region71: #{tpu_custom_call.1} parent=1 // pred_check_branch
      %633 = sbr.rel (0) target = $region73
    $region72: #{tpu_custom_call.1} parent=1 // pred_region
      %s635 = ssub.s32 64, 64
      %636 = vsyncadd [#allocation4], %s635
      %s638 = sshll.u32 [#allocation10], 4
      %s639 = int_to_ptr.vmem [resolvable:$true] %s638
      %641 = dma.vmem_to_hbm [thread:$0]  %s639, 64, %s13, [#allocation4]
    $region73: #{tpu_custom_call.1} parent=1 // pred_fallthru
      _
    // Predicated region
    $region74: #{tpu_custom_call.1} parent=1 // pred_check
      _
    $region75: #{tpu_custom_call.1} parent=1 // pred_check_branch
      %643 = sbr.rel (0) target = $region77
    $region76: #{tpu_custom_call.1} parent=1 // pred_region
      %644 = dma.done [#allocation4], 64
    $region77: #{tpu_custom_call.1} parent=1 // pred_fallthru
      _
    %645 = vsyncpa [#allocation3], 1
    %646 = vsyncpa [#allocation6], 1
    %647 = vsyncpa [#allocation9], 1
    %648 = vsyncpa [#allocation4], 1

</llo_original>
